<compile_context>
chip_gen: v7x
topology: tpu7x:2x2x1
jax: 0.10.0
libtpu: 0.0.40
codegen_flags: <defaults>
</compile_context>

<pallas_src>
import functools

import jax
import jax.numpy as jnp
from jax import lax
from jax.experimental import pallas as pl
from jax.experimental.pallas import tpu as pltpu


def _self_output_kernel(x_ref, res_ref, w_ref, b_ref, gamma_ref, beta_ref, out_ref, *, eps):
    """One (tm, H) row tile: out = LayerNorm(dropout(x @ W + b) + residual)."""
    # ---- dense ----  cast the activation tile to the weight dtype (bf16 by default) for
    # the MXU; accumulate in f32.
    x = x_ref[...].astype(w_ref.dtype)
    h = jnp.dot(x, w_ref[...], preferred_element_type=jnp.float32)
    h = h + b_ref[...].astype(jnp.float32)

    # ---- dropout ----  identity at inference.

    # ---- residual add (f32) ----
    h = h + res_ref[...].astype(jnp.float32)

    # ---- LayerNorm over hidden dim (biased variance, matches torch.nn.LayerNorm) ----
    mean = jnp.mean(h, axis=-1, keepdims=True)
    centered = h - mean
    var = jnp.mean(centered * centered, axis=-1, keepdims=True)
    normed = centered * lax.rsqrt(var + eps)          # eps is a Python float -> literal
    out_ref[...] = (normed * gamma_ref[...].astype(jnp.float32)
                    + beta_ref[...].astype(jnp.float32)).astype(out_ref.dtype)


def _round_up(n, m):
    return ((n + m - 1) // m) * m


def _vmem_budget_bytes():
    """Generation-aware VMEM request: leave headroom for compiler internal scratch."""
    try:
        cap = pltpu.get_tpu_info().vmem_capacity_bytes
    except Exception:
        cap = 128 << 20
    # v7x (64 MiB/TC) -> 48 MiB; v5e/v6e (128 MiB) -> 100 MiB.
    return min(cap - (16 << 20), 100 << 20)


def _pick_tm(tm_request, M, H, x_bytes, res_bytes, out_bytes, w_bytes, budget):
    """Largest row tile <= tm_request whose buffers fit the VMEM budget."""
    tm_eff = min(tm_request, _round_up(M, 8))
    resident = H * H * w_bytes + 3 * H * 4            # single-buffered weight + b/gamma/beta
    per_row = 2 * H * (x_bytes + res_bytes + out_bytes)  # double-buffered streams
    while tm_eff > 8 and resident + tm_eff * per_row > budget:
        tm_eff = max(8, tm_eff // 2)
    return _round_up(tm_eff, 8)


def former_self_output(hidden_states, input_tensor, params, *, eps=1e-12, tm=512,
                       matmul_dtype=jnp.bfloat16):
    """hidden_states, input_tensor: (B, S, H) -> (B, S, H) in the input dtype."""
    B, S, H = hidden_states.shape
    assert input_tensor.shape == (B, S, H)
    M = B * S
    out_dtype = hidden_states.dtype

    # Params are small / one-time: cast the weight to the matmul dtype in the wrapper,
    # keep the per-feature vectors in f32.
    w = params["dense_w"].astype(matmul_dtype)             # (H, H) pre-transposed (in, out)
    b = params["dense_b"].reshape(1, H).astype(jnp.float32)
    gamma = params["ln_gamma"].reshape(1, H).astype(jnp.float32)
    beta = params["ln_beta"].reshape(1, H).astype(jnp.float32)

    # Raw 2-D views of the activations — no pad, no astype copies.
    x2d = hidden_states.reshape(M, H)
    res2d = input_tensor.reshape(M, H)

    x_bytes = jnp.dtype(hidden_states.dtype).itemsize
    res_bytes = jnp.dtype(input_tensor.dtype).itemsize
    out_bytes = jnp.dtype(out_dtype).itemsize
    w_bytes = jnp.dtype(matmul_dtype).itemsize

    vmem_budget = _vmem_budget_bytes()
    tm_eff = _pick_tm(tm, M, H, x_bytes, res_bytes, out_bytes, w_bytes, vmem_budget)
    grid_m = pl.cdiv(M, tm_eff)

    kernel = functools.partial(_self_output_kernel, eps=float(eps))

    cost = pl.CostEstimate(
        flops=2 * M * H * H + 10 * M * H,
        transcendentals=M,                                  # one rsqrt per row
        bytes_accessed=(M * H * x_bytes                     # x
                        + M * H * res_bytes                 # residual
                        + H * H * w_bytes                   # dense weight
                        + 4 * H * 4                         # bias / gamma / beta
                        + M * H * out_bytes),               # output
    )

    out2d = pl.pallas_call(
        kernel,
        out_shape=jax.ShapeDtypeStruct((M, H), out_dtype),
        grid_spec=pltpu.PrefetchScalarGridSpec(
            num_scalar_prefetch=0,
            grid=(grid_m,),
            in_specs=[
                pl.BlockSpec((tm_eff, H), lambda i: (i, 0)),   # hidden_states row tile
                pl.BlockSpec((tm_eff, H), lambda i: (i, 0)),   # residual row tile
                pl.BlockSpec((H, H), lambda i: (0, 0),
                             pipeline_mode=pl.Buffered(1)),    # resident dense weight
                pl.BlockSpec((1, H), lambda i: (0, 0),
                             pipeline_mode=pl.Buffered(1)),    # dense bias
                pl.BlockSpec((1, H), lambda i: (0, 0),
                             pipeline_mode=pl.Buffered(1)),    # LN gamma
                pl.BlockSpec((1, H), lambda i: (0, 0),
                             pipeline_mode=pl.Buffered(1)),    # LN beta
            ],
            out_specs=pl.BlockSpec((tm_eff, H), lambda i: (i, 0)),
        ),
        compiler_params=pltpu.CompilerParams(
            dimension_semantics=("parallel",),    # row tiles shard across v7x's two TCs
            vmem_limit_bytes=vmem_budget,
        ),
        cost_estimate=cost,
    )(x2d, res2d, w, b, gamma, beta)

    return out2d.reshape(B, S, H)


def _reference(hidden_states, input_tensor, params, eps=1e-12):
    h = hidden_states @ params["dense_w"] + params["dense_b"]
    h = h + input_tensor
    mean = jnp.mean(h, axis=-1, keepdims=True)
    var = jnp.mean((h - mean) ** 2, axis=-1, keepdims=True)
    h = (h - mean) / jnp.sqrt(var + eps)
    return h * params["ln_gamma"] + params["ln_beta"]


def _make_params(key, H):
    k_w, k_b, k_g, k_beta = jax.random.split(key, 4)
    return {
        # nn.Linear(H, H): torch weight is (out, in); stored pre-transposed (in, out).
        "dense_w": jax.random.normal(k_w, (H, H), jnp.float32) * 0.05,
        "dense_b": jax.random.normal(k_b, (H,), jnp.float32) * 0.05,
        # nn.LayerNorm(H): defaults weight=1, bias=0; perturb slightly.
        "ln_gamma": 1.0 + 0.01 * jax.random.normal(k_g, (H,), jnp.float32),
        "ln_beta": 0.01 * jax.random.normal(k_beta, (H,), jnp.float32),
    }


if __name__ == "__main__":
    key = jax.random.PRNGKey(0)

    # --- small config (batch=2, seq=8, hidden=32), default bf16 matmul path ---
    batch, seq, hidden = 2, 8, 32
    k_p, k_x, k_r, key = jax.random.split(key, 4)
    params = _make_params(k_p, hidden)
    hidden_states = jax.random.normal(k_x, (batch, seq, hidden), jnp.float32)
    input_tensor = jax.random.normal(k_r, (batch, seq, hidden), jnp.float32)

    ref = _reference(hidden_states, input_tensor, params)

    out = jax.block_until_ready(former_self_output(hidden_states, input_tensor, params))
    assert out.shape == (batch, seq, hidden)
    assert out.dtype == hidden_states.dtype
    assert jnp.allclose(out, ref, atol=3e-2, rtol=3e-2), float(jnp.max(jnp.abs(out - ref)))

    # --- f32 matmul path (tight tolerance) ---
    out_f32 = jax.block_until_ready(
        former_self_output(hidden_states, input_tensor, params, matmul_dtype=jnp.float32))
    assert jnp.allclose(out_f32, ref, atol=1e-4, rtol=1e-4), \
        float(jnp.max(jnp.abs(out_f32 - ref)))

    # --- multi-tile path with a partial last row tile (M=300, tm=128 -> grid 3) ---
    b2, s2, h2 = 3, 100, 128
    k_p2, k_x2, k_r2, key = jax.random.split(key, 4)
    params2 = _make_params(k_p2, h2)
    hs2 = jax.random.normal(k_x2, (b2, s2, h2), jnp.float32)
    res2 = jax.random.normal(k_r2, (b2, s2, h2), jnp.float32)
    out2 = jax.block_until_ready(former_self_output(hs2, res2, params2, tm=128))
    ref2 = _reference(hs2, res2, params2)
    assert jnp.allclose(out2, ref2, atol=3e-2, rtol=3e-2), float(jnp.max(jnp.abs(out2 - ref2)))

    print("KERNEL_OK")
</pallas_src>

<mosaic_0001>
module attributes {stable_mosaic.version = 11 : i64} {
  func.func @_self_output_kernel(%arg0: i32, %arg1: memref<16x32xf32, #tpu.memory_space<vmem>>, %arg2: memref<16x32xf32, #tpu.memory_space<vmem>>, %arg3: memref<32x32xbf16, #tpu.memory_space<vmem>>, %arg4: memref<1x32xf32, #tpu.memory_space<vmem>>, %arg5: memref<1x32xf32, #tpu.memory_space<vmem>>, %arg6: memref<1x32xf32, #tpu.memory_space<vmem>>, %arg7: memref<16x32xf32, #tpu.memory_space<vmem>>) attributes {dimension_semantics = [#tpu.dimension_semantics<parallel>], iteration_bounds = array<i64: 1>, scalar_prefetch = 0 : i64, scratch_operands = 0 : i64, tpu.core_type = #tpu.core_type<tc>, window_params = [{transform_indices = @transform_0, window_bounds = array<i64: 16, 32>}, {transform_indices = @transform_1, window_bounds = array<i64: 16, 32>}, {pipeline_mode = #tpu.pipeline_mode<synchronous>, transform_indices = @transform_2, window_bounds = array<i64: 32, 32>}, {pipeline_mode = #tpu.pipeline_mode<synchronous>, transform_indices = @transform_3, window_bounds = array<i64: 1, 32>}, {pipeline_mode = #tpu.pipeline_mode<synchronous>, transform_indices = @transform_4, window_bounds = array<i64: 1, 32>}, {pipeline_mode = #tpu.pipeline_mode<synchronous>, transform_indices = @transform_5, window_bounds = array<i64: 1, 32>}, {transform_indices = @transform_6, window_bounds = array<i64: 16, 32>}]} {
    %c0 = arith.constant 0 : index
    %c0_0 = arith.constant 0 : index
    %0 = vector.load %arg1[%c0, %c0_0] : memref<16x32xf32, #tpu.memory_space<vmem>>, vector<16x32xf32>
    %1 = arith.truncf %0 : vector<16x32xf32> to vector<16x32xbf16>
    %c0_1 = arith.constant 0 : index
    %c0_2 = arith.constant 0 : index
    %2 = vector.load %arg3[%c0_1, %c0_2] : memref<32x32xbf16, #tpu.memory_space<vmem>>, vector<32x32xbf16>
    %cst = arith.constant dense<0.000000e+00> : vector<16x32xf32>
    %3 = tpu.matmul %1, %2, %cst {dimension_numbers = #tpu.dot_dimension_numbers<[1], [0], [0], [1], [0, 0, 1, 1], [], []>} : vector<16x32xbf16>, vector<32x32xbf16>, vector<16x32xf32> -> vector<16x32xf32>
    %c0_3 = arith.constant 0 : index
    %c0_4 = arith.constant 0 : index
    %4 = vector.load %arg4[%c0_3, %c0_4] : memref<1x32xf32, #tpu.memory_space<vmem>>, vector<1x32xf32>
    %5 = vector.broadcast %4 : vector<1x32xf32> to vector<16x32xf32>
    %6 = arith.addf %3, %5 : vector<16x32xf32>
    %c0_5 = arith.constant 0 : index
    %c0_6 = arith.constant 0 : index
    %7 = vector.load %arg2[%c0_5, %c0_6] : memref<16x32xf32, #tpu.memory_space<vmem>>, vector<16x32xf32>
    %8 = arith.addf %6, %7 : vector<16x32xf32>
    %cst_7 = arith.constant dense<0.000000e+00> : vector<16xf32>
    %9 = vector.multi_reduction <add>, %8, %cst_7 [1] : vector<16x32xf32> to vector<16xf32>
    %10 = vector.shape_cast %9 : vector<16xf32> to vector<16x1xf32>
    %cst_8 = arith.constant 3.200000e+01 : f32
    %11 = vector.broadcast %cst_8 : f32 to vector<16x1xf32>
    %12 = arith.divf %10, %11 : vector<16x1xf32>
    %13 = vector.broadcast %12 : vector<16x1xf32> to vector<16x32xf32>
    %14 = arith.subf %8, %13 : vector<16x32xf32>
    %15 = arith.mulf %14, %14 : vector<16x32xf32>
    %cst_9 = arith.constant dense<0.000000e+00> : vector<16xf32>
    %16 = vector.multi_reduction <add>, %15, %cst_9 [1] : vector<16x32xf32> to vector<16xf32>
    %17 = vector.shape_cast %16 : vector<16xf32> to vector<16x1xf32>
    %cst_10 = arith.constant 3.200000e+01 : f32
    %18 = vector.broadcast %cst_10 : f32 to vector<16x1xf32>
    %19 = arith.divf %17, %18 : vector<16x1xf32>
    %cst_11 = arith.constant 9.99999996E-13 : f32
    %20 = vector.broadcast %cst_11 : f32 to vector<16x1xf32>
    %21 = arith.addf %19, %20 : vector<16x1xf32>
    %22 = math.rsqrt %21 : vector<16x1xf32>
    %23 = vector.broadcast %22 : vector<16x1xf32> to vector<16x32xf32>
    %24 = arith.mulf %14, %23 : vector<16x32xf32>
    %c0_12 = arith.constant 0 : index
    %c0_13 = arith.constant 0 : index
    %25 = vector.load %arg5[%c0_12, %c0_13] : memref<1x32xf32, #tpu.memory_space<vmem>>, vector<1x32xf32>
    %26 = vector.broadcast %25 : vector<1x32xf32> to vector<16x32xf32>
    %27 = arith.mulf %24, %26 : vector<16x32xf32>
    %c0_14 = arith.constant 0 : index
    %c0_15 = arith.constant 0 : index
    %28 = vector.load %arg6[%c0_14, %c0_15] : memref<1x32xf32, #tpu.memory_space<vmem>>, vector<1x32xf32>
    %29 = vector.broadcast %28 : vector<1x32xf32> to vector<16x32xf32>
    %30 = arith.addf %27, %29 : vector<16x32xf32>
    %c0_16 = arith.constant 0 : index
    %c0_17 = arith.constant 0 : index
    %31 = vector.load %arg7[%c0_16, %c0_17] : memref<16x32xf32, #tpu.memory_space<vmem>>, vector<16x32xf32>
    tpu.vector_store %arg7[%c0_16, %c0_17], %30 {strides = array<i32>} : memref<16x32xf32, #tpu.memory_space<vmem>>, vector<16x32xf32>,
    return
  }
  func.func @transform_0(%arg0: i32) -> (i32, i32) {
    %c0_i32 = arith.constant 0 : i32
    %c0_i32_0 = arith.constant 0 : i32
    return %arg0, %c0_i32 : i32, i32
  }
  func.func @transform_1(%arg0: i32) -> (i32, i32) {
    %c0_i32 = arith.constant 0 : i32
    %c0_i32_0 = arith.constant 0 : i32
    return %arg0, %c0_i32 : i32, i32
  }
  func.func @transform_2(%arg0: i32) -> (i32, i32) {
    %c0_i32 = arith.constant 0 : i32
    %c0_i32_0 = arith.constant 0 : i32
    %c0_i32_1 = arith.constant 0 : i32
    return %c0_i32, %c0_i32_0 : i32, i32
  }
  func.func @transform_3(%arg0: i32) -> (i32, i32) {
    %c0_i32 = arith.constant 0 : i32
    %c0_i32_0 = arith.constant 0 : i32
    %c0_i32_1 = arith.constant 0 : i32
    return %c0_i32, %c0_i32_0 : i32, i32
  }
  func.func @transform_4(%arg0: i32) -> (i32, i32) {
    %c0_i32 = arith.constant 0 : i32
    %c0_i32_0 = arith.constant 0 : i32
    %c0_i32_1 = arith.constant 0 : i32
    return %c0_i32, %c0_i32_0 : i32, i32
  }
  func.func @transform_5(%arg0: i32) -> (i32, i32) {
    %c0_i32 = arith.constant 0 : i32
    %c0_i32_0 = arith.constant 0 : i32
    %c0_i32_1 = arith.constant 0 : i32
    return %c0_i32, %c0_i32_0 : i32, i32
  }
  func.func @transform_6(%arg0: i32) -> (i32, i32) {
    %c0_i32 = arith.constant 0 : i32
    %c0_i32_0 = arith.constant 0 : i32
    return %arg0, %c0_i32 : i32, i32
  }
}

</mosaic_0001>

<llo_original>
// kernel: tpu_custom_call.1
$region0: #{tpu_custom_call.1}
  #allocation0 [shape = 'u32[]', space=smem, size = 0x4, offset = 0x4, fixed_abs, tag = 'smem constant byte address 0x4 - core index']
  #allocation1 [shape = 'u32[144,128]{1,0:T(1,128)}', space=vmem, size = 0x12000, scoped, tag = 'internal scratch']
  %s0 = inlined_call_operand.hbm [shape: f32[16,32], index: 0, kind: input, shape index: {}]
  %s1 = inlined_call_operand.hbm [shape: f32[16,32], index: 1, kind: input, shape index: {}]
  %s2 = inlined_call_operand.hbm [shape: bf16[32,32], index: 2, kind: input, shape index: {}]
  %s3 = inlined_call_operand.hbm [shape: f32[1,32], index: 3, kind: input, shape index: {}]
  %s4 = inlined_call_operand.hbm [shape: f32[1,32], index: 4, kind: input, shape index: {}]
  %s5 = inlined_call_operand.hbm [shape: f32[1,32], index: 5, kind: input, shape index: {}]
  %s6 = inlined_call_operand.hbm [shape: f32[16,32], index: 6, kind: output, shape index: {}]
  %s7 = sld [smem:[#allocation0]]
  $region58: #{tpu_custom_call.1} parent=0
    _
  %s9 = ssub.s32 1, %s7
  %s10 = scalar_select 0, %s9, %s7
  $region1: #{tpu_custom_call.1} parent=0
    #allocation2 [shape = 'u8[8192]{0}', space=vmem, size = 0x2000, scoped, tag = 'input window, operand 0, single buffered']
    #allocation3 [shape = 's32[1]{0}', space=sflag, size = 0x4, scoped, tag = 'scoped memory for tpu_custom_call.1']
    #allocation4 [shape = 's32[1]{0}', space=sflag, size = 0x4, scoped, tag = 'scoped memory for tpu_custom_call.1']
    #allocation5 [shape = 'u8[8192]{0}', space=vmem, size = 0x2000, scoped, tag = 'input window, operand 1, single buffered']
    #allocation6 [shape = 's32[1]{0}', space=sflag, size = 0x4, scoped, tag = 'scoped memory for tpu_custom_call.1']
    #allocation7 [shape = 'u8[8192]{0}', space=vmem, size = 0x2000, scoped, tag = 'input window, operand 2, single buffered']
    #allocation8 [shape = 'u8[512]{0}', space=vmem, size = 0x400, scoped, tag = 'input window, operand 3, single buffered']
    #allocation9 [shape = 's32[1]{0}', space=sflag, size = 0x4, scoped, tag = 'scoped memory for tpu_custom_call.1']
    #allocation10 [shape = 'u8[512]{0}', space=vmem, size = 0x400, scoped, tag = 'input window, operand 4, single buffered']
    #allocation11 [shape = 'u8[512]{0}', space=vmem, size = 0x400, scoped, tag = 'input window, operand 5, single buffered']
    #allocation12 [shape = 's32[1]{0}', space=sflag, size = 0x4, scoped, tag = 'scoped memory for tpu_custom_call.1']
    #allocation13 [shape = 'u8[8192]{0}', space=vmem, size = 0x2000, scoped, tag = 'output window, operand 0, single buffered']
    %11 = vsyncpa [#allocation3], 0
    %12 = vsyncpa [#allocation6], 0
    %13 = vsyncpa [#allocation9], 0
    %14 = vsyncpa [#allocation12], 0
    %15 = vsyncpa [#allocation4], 0
    // Predicated region
    $region2: #{tpu_custom_call.1} parent=1 // pred_check
      _
    $region3: #{tpu_custom_call.1} parent=1 // pred_check_branch
      %17 = sbr.rel (0) target = $region5
    $region4: #{tpu_custom_call.1} parent=1 // pred_region
      %s19 = ssub.s32 256, 256
      %20 = vsyncadd [#allocation3], %s19
      %s21 = sshll.u32 [#allocation2], 4
      %s22 = int_to_ptr.vmem [resolvable:$true] %s21
      %27 = dma.hbm_to_vmem [thread:$0]  %s0, 256, %s22, [#allocation3], 128, 128, 8
    $region5: #{tpu_custom_call.1} parent=1 // pred_fallthru
      _
    // Predicated region
    $region6: #{tpu_custom_call.1} parent=1 // pred_check
      _
    $region7: #{tpu_custom_call.1} parent=1 // pred_check_branch
      %29 = sbr.rel (0) target = $region9
    $region8: #{tpu_custom_call.1} parent=1 // pred_region
      %s31 = ssub.s32 256, 256
      %32 = vsyncadd [#allocation6], %s31
      %s33 = sshll.u32 [#allocation5], 4
      %s34 = int_to_ptr.vmem [resolvable:$true] %s33
      %39 = dma.hbm_to_vmem [thread:$0]  %s1, 256, %s34, [#allocation6], 128, 128, 8
    $region9: #{tpu_custom_call.1} parent=1 // pred_fallthru
      _
    // Predicated region
    $region10: #{tpu_custom_call.1} parent=1 // pred_check
      _
    $region11: #{tpu_custom_call.1} parent=1 // pred_check_branch
      %41 = sbr.rel (0) target = $region13
    $region12: #{tpu_custom_call.1} parent=1 // pred_region
      %s43 = ssub.s32 256, 256
      %44 = vsyncadd [#allocation6], %s43
      %s45 = sshll.u32 [#allocation7], 4
      %s46 = int_to_ptr.vmem [resolvable:$true] %s45
      %51 = dma.hbm_to_vmem [thread:$0]  %s2, 256, %s46, [#allocation6], 64, 64, 4
    $region13: #{tpu_custom_call.1} parent=1 // pred_fallthru
      _
    // Predicated region
    $region14: #{tpu_custom_call.1} parent=1 // pred_check
      _
    $region15: #{tpu_custom_call.1} parent=1 // pred_check_branch
      %53 = sbr.rel (0) target = $region17
    $region16: #{tpu_custom_call.1} parent=1 // pred_region
      %s55 = ssub.s32 16, 16
      %56 = vsyncadd [#allocation9], %s55
      %s58 = sshll.u32 [#allocation8], 4
      %s59 = int_to_ptr.vmem [resolvable:$true] %s58
      %61 = dma.hbm_to_vmem [thread:$0]  %s3, 16, %s59, [#allocation9]
    $region17: #{tpu_custom_call.1} parent=1 // pred_fallthru
      _
    // Predicated region
    $region18: #{tpu_custom_call.1} parent=1 // pred_check
      _
    $region19: #{tpu_custom_call.1} parent=1 // pred_check_branch
      %63 = sbr.rel (0) target = $region21
    $region20: #{tpu_custom_call.1} parent=1 // pred_region
      %s65 = ssub.s32 16, 16
      %66 = vsyncadd [#allocation9], %s65
      %s68 = sshll.u32 [#allocation10], 4
      %s69 = int_to_ptr.vmem [resolvable:$true] %s68
      %71 = dma.hbm_to_vmem [thread:$0]  %s4, 16, %s69, [#allocation9]
    $region21: #{tpu_custom_call.1} parent=1 // pred_fallthru
      _
    // Predicated region
    $region22: #{tpu_custom_call.1} parent=1 // pred_check
      _
    $region23: #{tpu_custom_call.1} parent=1 // pred_check_branch
      %73 = sbr.rel (0) target = $region25
    $region24: #{tpu_custom_call.1} parent=1 // pred_region
      %s75 = ssub.s32 16, 16
      %76 = vsyncadd [#allocation12], %s75
      %s78 = sshll.u32 [#allocation11], 4
      %s79 = int_to_ptr.vmem [resolvable:$true] %s78
      %81 = dma.hbm_to_vmem [thread:$0]  %s5, 16, %s79, [#allocation12]
    $region25: #{tpu_custom_call.1} parent=1 // pred_fallthru
      _
    // Predicated region
    $region26: #{tpu_custom_call.1} parent=1 // pred_check
      _
    $region27: #{tpu_custom_call.1} parent=1 // pred_check_branch
      %83 = sbr.rel (0) target = $region29
    $region28: #{tpu_custom_call.1} parent=1 // pred_region
      %84 = dma.done [#allocation3], 256
    $region29: #{tpu_custom_call.1} parent=1 // pred_fallthru
      _
    // Predicated region
    $region30: #{tpu_custom_call.1} parent=1 // pred_check
      _
    $region31: #{tpu_custom_call.1} parent=1 // pred_check_branch
      %86 = sbr.rel (0) target = $region33
    $region32: #{tpu_custom_call.1} parent=1 // pred_region
      %87 = dma.done [#allocation6], 256
    $region33: #{tpu_custom_call.1} parent=1 // pred_fallthru
      _
    // Predicated region
    $region34: #{tpu_custom_call.1} parent=1 // pred_check
      _
    $region35: #{tpu_custom_call.1} parent=1 // pred_check_branch
      %89 = sbr.rel (0) target = $region37
    $region36: #{tpu_custom_call.1} parent=1 // pred_region
      %90 = dma.done [#allocation6], 256
    $region37: #{tpu_custom_call.1} parent=1 // pred_fallthru
      _
    // Predicated region
    $region38: #{tpu_custom_call.1} parent=1 // pred_check
      _
    $region39: #{tpu_custom_call.1} parent=1 // pred_check_branch
      %92 = sbr.rel (0) target = $region41
    $region40: #{tpu_custom_call.1} parent=1 // pred_region
      %93 = dma.done [#allocation9], 16
    $region41: #{tpu_custom_call.1} parent=1 // pred_fallthru
      _
    // Predicated region
    $region42: #{tpu_custom_call.1} parent=1 // pred_check
      _
    $region43: #{tpu_custom_call.1} parent=1 // pred_check_branch
      %95 = sbr.rel (0) target = $region45
    $region44: #{tpu_custom_call.1} parent=1 // pred_region
      %96 = dma.done [#allocation9], 16
    $region45: #{tpu_custom_call.1} parent=1 // pred_fallthru
      _
    // Predicated region
    $region46: #{tpu_custom_call.1} parent=1 // pred_check
      _
    $region47: #{tpu_custom_call.1} parent=1 // pred_check_branch
      %98 = sbr.rel (0) target = $region49
    $region48: #{tpu_custom_call.1} parent=1 // pred_region
      %99 = dma.done [#allocation12], 16
    $region49: #{tpu_custom_call.1} parent=1 // pred_fallthru
      _
    %v101 = vld [vmem:[#allocation2] sm:$0xff]
    %v102 = vld [vmem:[#allocation2 + $0x8] sm:$0xff]
    %v103 = vpack.c.bf16 %v102, %v101
    %v104 = vld [vmem:[#allocation7] sm:$0xf]
    %v105 = vld [vmem:[#allocation7 + $0x4] sm:$0xf]
    %v106 = vld [vmem:[#allocation7 + $0x8] sm:$0xf]
    %v107 = vld [vmem:[#allocation7 + $0xc] sm:$0xf]
    %v108 = vld [vmem:[#allocation8] sm:$0x1]
    %v110 = vlaneseq
    %v111 = vshrl.u32 %v110, 7
    %v112 = vsub.s32 0, %v111
    %v113 = vrot.slane %v108, %v112
    %v119 = vunpack.c.l.b16 %v104
    %v120 = vunpack.c.l.b16 %v105
    %v121 = vunpack.c.l.b16 %v106
    %v122 = vunpack.c.l.b16 %v107
    %v123 = vpack.c.b16 %v120, %v119
    %v124 = vpack.c.b16 %v122, %v121
    %vm127 = vcmask 261120
    %v129 = vsel %vm127, %v103, 0
    %131 = vmatprep.subr.bf16.mxu0 0
    %132 = vmatpush1.bf16.msra.mxu0 %v123
    %133 = vmatprep.subr.bf16.mxu0 0
    %134 = vmatpush1.bf16.msra.mxu0 %v124
    %135 = vmatprep.subr.bf16.mxu0 0
    %136 = vmatpush1.bf16.msra.mxu0 0
    %137 = vmatprep.subr.bf16.mxu0 0
    %138 = vmatpush1.bf16.msra.mxu0 0
    %139 = vmatprep.subr.bf16.mxu0 0
    %140 = vmatpush1.bf16.msra.mxu0 0
    %141 = vmatprep.subr.bf16.mxu0 0
    %142 = vmatpush1.bf16.msra.mxu0 0
    %143 = vmatprep.subr.bf16.mxu0 0
    %144 = vmatpush1.bf16.msra.mxu0 0
    %145 = vmatprep.subr.bf16.mxu0 0
    %146 = vmatpush1.bf16.msra.mxu0 0
    %147 = vmatprep.subr.bf16.mxu0 0
    %148 = vmatpush1.bf16.msra.mxu0 0
    %149 = vmatprep.subr.bf16.mxu0 0
    %150 = vmatpush1.bf16.msra.mxu0 0
    %151 = vmatprep.subr.bf16.mxu0 0
    %152 = vmatpush1.bf16.msra.mxu0 0
    %153 = vmatprep.subr.bf16.mxu0 0
    %154 = vmatpush1.bf16.msra.mxu0 0
    %155 = vmatprep.subr.bf16.mxu0 0
    %156 = vmatpush1.bf16.msra.mxu0 0
    %157 = vmatprep.subr.bf16.mxu0 0
    %158 = vmatpush1.bf16.msra.mxu0 0
    %159 = vmatprep.subr.bf16.mxu0 0
    %160 = vmatpush1.bf16.msra.mxu0 0
    %161 = vmatprep.subr.bf16.mxu0 0
    %162 = vmatpush1.bf16.msra.mxu0 0
    %163 = vmatprep.mubr.bf16.mxu0 0
    %164 = vmatmul.mubr.bf16.gmra.mrb[0].mxu0 %v129
    %v165 = vpop.f32.mrb[0].mxu0
    %v166 = vadd.f32 %v113, %v165
    %v167 = vpop.f32.mrb[0].mxu0
    %v168 = vpop.f32.mrb[0].mxu0
    %v169 = vadd.f32 %v113, %v168
    %v170 = vpop.f32.mrb[0].mxu0
    %171 = vdwg.mxu0
    %v172 = vld [vmem:[#allocation5] sm:$0xff]
    %v173 = vld [vmem:[#allocation5 + $0x8] sm:$0xff]
    %v174 = vadd.f32 %v166, %v172
    %v175 = vadd.f32 %v169, %v173
    %v176 = vsel %vm127, %v174, 0.0
    %177 = vadd.xlane.f32.xlu0 %v176
    %v178 = vpop.xlane.xlu0 %177
    %v179 = vsel %vm127, %v175, 0.0
    %180 = vadd.xlane.f32.xlu0 %v179
    %v181 = vpop.xlane.xlu0 %180
    %v182 = vrcp.pop 32.0
    %v183 = vmul.f32 %v178, %v182
    %v184 = vmul.f32 %v181, %v182
    %v185 = vsub.f32 %v174, %v183
    %v186 = vsub.f32 %v175, %v184
    %v187 = vmul.f32 %v185, %v185
    %v188 = vmul.f32 %v186, %v186
    %v189 = vsel %vm127, %v187, 0.0
    %190 = vadd.xlane.f32.xlu0 %v189
    %v191 = vpop.xlane.xlu0 %190
    %v192 = vsel %vm127, %v188, 0.0
    %193 = vadd.xlane.f32.xlu0 %v192
    %v194 = vpop.xlane.xlu0 %193
    %v195 = vmul.f32 %v191, %v182
    %v196 = vmul.f32 %v194, %v182
    %v197 = vadd.f32 %v195, 1e-12
    %v198 = vadd.f32 %v196, 1e-12
    %v199 = vrsqrt.pop %v197
    %v200 = vrsqrt.pop %v198
    %v201 = vmul.f32 %v185, %v199
    %v202 = vmul.f32 %v186, %v200
    %v203 = vld [vmem:[#allocation10] sm:$0x1]
    %v205 = vlaneseq
    %v206 = vshrl.u32 %v205, 7
    %v207 = vsub.s32 0, %v206
    %v208 = vrot.slane %v203, %v207
    %v210 = vmul.f32 %v201, %v208
    %v211 = vmul.f32 %v202, %v208
    %v212 = vld [vmem:[#allocation11] sm:$0x1]
    %v214 = vlaneseq
    %v215 = vshrl.u32 %v214, 7
    %v216 = vsub.s32 0, %v215
    %v217 = vrot.slane %v212, %v216
    %v219 = vadd.f32 %v210, %v217
    %v220 = vadd.f32 %v211, %v217
    %221 = vst.msk [vmem:[#allocation13] sm:$0xff] %vm127, %v219
    %222 = vst.msk [vmem:[#allocation13 + $0x8] sm:$0xff] %vm127, %v220
    // Predicated region
    $region50: #{tpu_custom_call.1} parent=1 // pred_check
      _
    $region51: #{tpu_custom_call.1} parent=1 // pred_check_branch
      %224 = sbr.rel (0) target = $region53
    $region52: #{tpu_custom_call.1} parent=1 // pred_region
      %s226 = ssub.s32 256, 256
      %227 = vsyncadd [#allocation4], %s226
      %s228 = sshll.u32 [#allocation13], 4
      %s229 = int_to_ptr.vmem [resolvable:$true] %s228
      %234 = dma.vmem_to_hbm [thread:$0]  %s229, 256, %s6, [#allocation4], 128, 128, 8
    $region53: #{tpu_custom_call.1} parent=1 // pred_fallthru
      _
    // Predicated region
    $region54: #{tpu_custom_call.1} parent=1 // pred_check
      _
    $region55: #{tpu_custom_call.1} parent=1 // pred_check_branch
      %236 = sbr.rel (0) target = $region57
    $region56: #{tpu_custom_call.1} parent=1 // pred_region
      %237 = dma.done [#allocation4], 256
    $region57: #{tpu_custom_call.1} parent=1 // pred_fallthru
      _
    %238 = vsyncpa [#allocation3], 1
    %239 = vsyncpa [#allocation6], 1
    %240 = vsyncpa [#allocation9], 1
    %241 = vsyncpa [#allocation12], 1
    %242 = vsyncpa [#allocation4], 1

</llo_original>
